<compile_context>
chip_gen: v6e
topology: v6e:2x2x1
jax: 0.10.0
libtpu: 0.0.40
codegen_flags: <defaults>
</compile_context>

<pallas_src>
import functools
import math
import warnings

import jax
import jax.numpy as jnp
from jax.experimental import pallas as pl
from jax.experimental.pallas import tpu as pltpu

# Donation of state buffers is a perf hint; if XLA cannot alias for some
# reason it falls back to a copy and emits a harmless warning.
warnings.filterwarnings("ignore", message="Some donated buffers were not usable")

# ----------------------------------------------------------------------------
# LIF parameters (deterministic, standard values; mirrors LIF_PARAMS / DT)
# ----------------------------------------------------------------------------
DT = 1.0                    # ms
LIF_PARAMS = dict(
    v_rest=-65.0,
    v_reset=-70.0,
    v_thresh=-50.0,
    tau_m=20.0,             # ms
    tau_ref=2.0,            # ms
    adaptation_rate=0.05,
    min_thresh=-55.0,
    max_thresh=-45.0,
)
DECAY_FACTOR = math.exp(-DT / LIF_PARAMS["tau_m"])

LANES = 128
ROW_ALIGN = 32              # keeps f32 (8,128) / bf16 (16,128) / int8 (32,128) tiles aligned
MAX_BLOCK_ROWS = 2048       # 2048 x 128 f32 = 1 MiB per array per pipeline buffer
VMEM_LIMIT_BYTES = 32 * 1024 * 1024   # explicit: covers v5e's 16 MiB scoped default


def _round_up(x, m):
    return (x + m - 1) // m * m


def _tile_rows(n):
    """Padded row count of the persistent (rows, 128) layout for n neurons."""
    return _round_up(pl.cdiv(n, LANES), ROW_ALIGN)


def _block_layout(rows_padded):
    """(block_rows, grid_rows) for a (rows_padded, 128) array.

    * block_rows is a multiple of ROW_ALIGN -> aligned blocks for f32/bf16/int8.
    * >= 2 row blocks whenever there is enough work, so the "parallel" row
      axis can be sharded across both v7x TensorCores.
    * grid = cdiv(rows, block_rows): Pallas masks the partial last block, so
      the array itself is never padded up to a MAX_BLOCK_ROWS multiple.
    """
    if rows_padded <= ROW_ALIGN:
        block_rows = rows_padded
    else:
        half = _round_up(pl.cdiv(rows_padded, 2), ROW_ALIGN)
        block_rows = min(MAX_BLOCK_ROWS, half)
    return block_rows, pl.cdiv(rows_padded, block_rows)


# ----------------------------------------------------------------------------
# Shared elementwise LIF update (pure VPU; traced inside both kernels)
# ----------------------------------------------------------------------------
def _lif_update(t, psc, v, thr, refrac, last):
    v_rest = jnp.float32(LIF_PARAMS["v_rest"])
    v_reset = jnp.float32(LIF_PARAMS["v_reset"])
    tau_ref = jnp.float32(LIF_PARAMS["tau_ref"])
    decay = jnp.float32(DECAY_FACTOR)
    adapt = jnp.float32(LIF_PARAMS["adaptation_rate"])
    min_th = jnp.float32(LIF_PARAMS["min_thresh"])
    max_th = jnp.float32(LIF_PARAMS["max_thresh"])

    # 1) integrate only where not refractory
    not_in_ref = refrac <= 0.0
    v_new = jnp.where(not_in_ref, v_rest + (v - v_rest) * decay + psc, v)

    # 2) clamp membrane potential (torch clamp_ applies to all neurons)
    v_new = jnp.clip(v_new, -100.0, 0.0)

    # 3) spike detection
    spikes = jnp.logical_and(v_new >= thr, not_in_ref)

    # 4) spike side effects (equivalent to the `if torch.any(spikes)` block:
    #    every update there is masked by `spikes`, so branch-free is identical)
    last_new = jnp.where(spikes, t, last)
    v_new = jnp.where(spikes, v_reset, v_new)
    refrac_new = jnp.where(spikes, tau_ref, refrac)

    # 5) refractory countdown decay
    refrac_new = jnp.maximum(refrac_new - jnp.float32(DT), 0.0)

    # 6) intrinsic plasticity (dynamic threshold adaptation)
    target = jnp.where(spikes, max_th, min_th)
    thr_new = thr + adapt * (target - thr)

    return spikes, v_new, thr_new, refrac_new, last_new


# ----------------------------------------------------------------------------
# Kernel 1: single LIF time step over a row-block grid
# ----------------------------------------------------------------------------
def _lif_step_kernel(t_ref,              # SMEM (1,1) f32: current_time_ms
                     psc_ref,            # VMEM (BR,128)
                     v_ref, thr_ref, refrac_ref, last_ref,   # VMEM (BR,128) f32
                     spikes_out, v_out, thr_out, refrac_out, last_out):
    t = t_ref[0, 0]
    psc = psc_ref[...].astype(jnp.float32)
    spk, v_new, thr_new, refrac_new, last_new = _lif_update(
        t, psc, v_ref[...], thr_ref[...], refrac_ref[...], last_ref[...])
    spikes_out[...] = spk.astype(jnp.float32)
    v_out[...] = v_new
    thr_out[...] = thr_new
    refrac_out[...] = refrac_new
    last_out[...] = last_new


# ----------------------------------------------------------------------------
# Kernel 2: T fused time steps; state lives in the resident output blocks
# (output index_map ignores the trailing "arbitrary" time axis). Only psc[t]
# (caller dtype, e.g. bf16) and spikes[t] (int8) stream through HBM per step.
# ----------------------------------------------------------------------------
def _lif_multistep_kernel(times_ref,     # SMEM (T,) f32
                          psc_ref,       # VMEM (1,BR,128)  psc[t] block
                          v_ref, thr_ref, refrac_ref, last_ref,   # (BR,128) in
                          spikes_out,    # VMEM (1,BR,128) int8  spikes[t] block
                          v_out, thr_out, refrac_out, last_out):  # (BR,128) resident
    t_idx = pl.program_id(1)

    @pl.when(t_idx == 0)
    def _():
        # Initialize the resident carry from the state inputs at the first
        # time step of each row block.
        v_out[...] = v_ref[...]
        thr_out[...] = thr_ref[...]
        refrac_out[...] = refrac_ref[...]
        last_out[...] = last_ref[...]

    t = times_ref[t_idx]
    psc = psc_ref[0].astype(jnp.float32)
    spk, v_new, thr_new, refrac_new, last_new = _lif_update(
        t, psc, v_out[...], thr_out[...], refrac_out[...], last_out[...])

    spikes_out[0] = jnp.where(spk, 1, 0).astype(spikes_out.dtype)
    v_out[...] = v_new
    thr_out[...] = thr_new
    refrac_out[...] = refrac_new
    last_out[...] = last_new
    # TODO(synk): if a profile shows exposed DMA per time step, deepen the
    # psc/spikes seq specs with pipeline_mode=pl.Buffered(3) (VMEM fits).


# ----------------------------------------------------------------------------
# Layout conversion helpers (model-boundary only; the hot loop stays tiled)
# ----------------------------------------------------------------------------
def _to_tiles(x, rows_padded, dtype=None):
    """(..., n) -> (..., rows_padded, 128), zero-padded."""
    n = x.shape[-1]
    if dtype is not None:
        x = x.astype(dtype)
    pad = rows_padded * LANES - n
    if pad:
        x = jnp.pad(x, [(0, 0)] * (x.ndim - 1) + [(0, pad)])
    return x.reshape(x.shape[:-1] + (rows_padded, LANES))


def _from_tiles(x, n):
    """(..., rows_padded, 128) -> (..., n)."""
    flat = x.reshape(x.shape[:-2] + (x.shape[-2] * LANES,))
    return flat if flat.shape[-1] == n else flat[..., :n]


# ----------------------------------------------------------------------------
# Tiled-state API (persistent (rows_padded, 128) f32 state; aliased in place)
# ----------------------------------------------------------------------------
@functools.partial(jax.jit, donate_argnums=(2, 3, 4, 5))
def lif_step_tiled(psc_tile, current_time_ms, v_t, thr_t, refrac_t, last_t):
    """One LIF step on tiled state. Returns (spikes_tile f32, v, thr, refrac, last)."""
    rows_padded = v_t.shape[0]
    block_rows, grid_rows = _block_layout(rows_padded)

    t_smem = jnp.asarray(current_time_ms, jnp.float32).reshape(1, 1)
    vec_spec = pl.BlockSpec((block_rows, LANES), lambda i: (i, 0))
    smem_spec = pl.BlockSpec(memory_space=pltpu.SMEM)

    out_shape = tuple(jax.ShapeDtypeStruct((rows_padded, LANES), jnp.float32)
                      for _ in range(5))

    return pl.pallas_call(
        _lif_step_kernel,
        out_shape=out_shape,
        grid=(grid_rows,),
        in_specs=[smem_spec] + [vec_spec] * 5,
        out_specs=(vec_spec,) * 5,
        # v -> v_out, thr -> thr_out, refrac -> refrac_out, last -> last_out
        input_output_aliases={2: 1, 3: 2, 4: 3, 5: 4},
        compiler_params=pltpu.CompilerParams(
            dimension_semantics=("parallel",),
            vmem_limit_bytes=VMEM_LIMIT_BYTES),
    )(t_smem, psc_tile, v_t, thr_t, refrac_t, last_t)


@functools.partial(jax.jit, donate_argnums=(2, 3, 4, 5))
def lif_steps_tiled(psc_seq_tiles, times, v_t, thr_t, refrac_t, last_t):
    """T fused LIF steps on tiled state.

    psc_seq_tiles: (T, rows_padded, 128) in any float dtype (bf16 recommended).
    Returns (spikes (T, rows_padded, 128) int8, final v/thr/refrac/last f32 tiles).
    """
    T = psc_seq_tiles.shape[0]
    rows_padded = v_t.shape[0]
    block_rows, grid_rows = _block_layout(rows_padded)

    times_smem = times.astype(jnp.float32).reshape(T)
    vec_spec = pl.BlockSpec((block_rows, LANES), lambda i, t: (i, 0))
    seq_spec = pl.BlockSpec((1, block_rows, LANES), lambda i, t: (t, i, 0))
    smem_spec = pl.BlockSpec(memory_space=pltpu.SMEM)

    out_shape = (jax.ShapeDtypeStruct((T, rows_padded, LANES), jnp.int8),) + tuple(
        jax.ShapeDtypeStruct((rows_padded, LANES), jnp.float32) for _ in range(4))

    return pl.pallas_call(
        _lif_multistep_kernel,
        out_shape=out_shape,
        grid=(grid_rows, T),
        in_specs=[smem_spec, seq_spec] + [vec_spec] * 4,
        out_specs=(seq_spec,) + (vec_spec,) * 4,
        input_output_aliases={2: 1, 3: 2, 4: 3, 5: 4},
        compiler_params=pltpu.CompilerParams(
            dimension_semantics=("parallel", "arbitrary"),
            vmem_limit_bytes=VMEM_LIMIT_BYTES),
    )(times_smem, psc_seq_tiles, v_t, thr_t, refrac_t, last_t)


# ----------------------------------------------------------------------------
# (n,)-boundary wrappers (match LIFNeuron.forward signature/semantics)
# ----------------------------------------------------------------------------
def lif_forward(postsynaptic_current, current_time_ms, v, dynamic_threshold,
                refractory_countdown, last_spike_times):
    """One LIF time step on flat (num_neurons,) state.

    Returns (spikes_float, new_v, new_threshold, new_refractory, new_last_spike).
    For a hot stateful loop, prefer lif_step_tiled / lif_steps_tiled on tiled
    state (no per-step pad/slice, true in-place aliasing).
    """
    n = postsynaptic_current.shape[0]
    rows_padded = _tile_rows(n)
    outs = lif_step_tiled(
        _to_tiles(postsynaptic_current, rows_padded, jnp.float32),
        current_time_ms,
        _to_tiles(v, rows_padded, jnp.float32),
        _to_tiles(dynamic_threshold, rows_padded, jnp.float32),
        _to_tiles(refractory_countdown, rows_padded, jnp.float32),
        _to_tiles(last_spike_times, rows_padded, jnp.float32))
    return tuple(_from_tiles(o, n) for o in outs)


def lif_forward_steps(psc_seq, times, v, dynamic_threshold,
                      refractory_countdown, last_spike_times):
    """T fused LIF steps on flat state.

    psc_seq: (T, n) any float dtype (bf16 recommended: cast to f32 in-kernel),
    times: (T,) f32. Returns (spikes_seq (T, n) int8, final v/thr/refrac/last f32).
    """
    T, n = psc_seq.shape
    rows_padded = _tile_rows(n)
    outs = lif_steps_tiled(
        _to_tiles(psc_seq, rows_padded),            # keep caller dtype
        times,
        _to_tiles(v, rows_padded, jnp.float32),
        _to_tiles(dynamic_threshold, rows_padded, jnp.float32),
        _to_tiles(refractory_countdown, rows_padded, jnp.float32),
        _to_tiles(last_spike_times, rows_padded, jnp.float32))
    spikes_seq = _from_tiles(outs[0], n)            # (T, n) int8
    state = tuple(_from_tiles(o, n) for o in outs[1:])
    return (spikes_seq,) + state


# ----------------------------------------------------------------------------
# State initialization (flat and tiled).  Invariant for the tiled layout:
# pad neurons get psc=0, v=v_rest, thr=v_thresh -> they can never spike
# (v stays <= 0 << threshold), so the pad region is inert.
# ----------------------------------------------------------------------------
def init_state(n):
    v0 = jnp.full((n,), LIF_PARAMS["v_rest"], jnp.float32)
    thr0 = jnp.full((n,), LIF_PARAMS["v_thresh"], jnp.float32)
    refrac0 = jnp.zeros((n,), jnp.float32)
    last0 = jnp.full((n,), -jnp.inf, jnp.float32)
    return v0, thr0, refrac0, last0


def init_state_tiled(n):
    shape = (_tile_rows(n), LANES)
    v0 = jnp.full(shape, LIF_PARAMS["v_rest"], jnp.float32)
    thr0 = jnp.full(shape, LIF_PARAMS["v_thresh"], jnp.float32)
    refrac0 = jnp.zeros(shape, jnp.float32)
    last0 = jnp.full(shape, -jnp.inf, jnp.float32)
    return v0, thr0, refrac0, last0


# TODO(synk): get_state()/reset() are host-side utilities (no kernel needed).


# ----------------------------------------------------------------------------
# Pure-JAX reference
# ----------------------------------------------------------------------------
def lif_ref(psc, t, v, thr, refrac, last):
    not_ref = refrac <= 0.0
    v_new = jnp.where(not_ref,
                      LIF_PARAMS["v_rest"]
                      + (v - LIF_PARAMS["v_rest"]) * DECAY_FACTOR + psc,
                      v)
    v_new = jnp.clip(v_new, -100.0, 0.0)
    spikes = (v_new >= thr) & not_ref
    last_new = jnp.where(spikes, t, last)
    v_new = jnp.where(spikes, LIF_PARAMS["v_reset"], v_new)
    refrac_new = jnp.where(spikes, LIF_PARAMS["tau_ref"], refrac)
    refrac_new = jnp.maximum(refrac_new - DT, 0.0)
    target = jnp.where(spikes, LIF_PARAMS["max_thresh"], LIF_PARAMS["min_thresh"])
    thr_new = thr + LIF_PARAMS["adaptation_rate"] * (target - thr)
    return spikes.astype(jnp.float32), v_new, thr_new, refrac_new, last_new


if __name__ == "__main__":
    num_neurons = 256
    key = jax.random.PRNGKey(0)
    k1, k2, k3 = jax.random.split(key, 3)
    t_ms = 5.0

    # --- 1) single step, module-boundary API, vs reference ---
    psc = 10.0 + 10.0 * jax.random.uniform(k1, (num_neurons,), jnp.float32)
    ref = lif_ref(psc, jnp.float32(t_ms), *init_state(num_neurons))
    out = jax.block_until_ready(lif_forward(psc, t_ms, *init_state(num_neurons)))
    for got, exp in zip(out, ref):
        assert jnp.allclose(got, exp, atol=1e-5), "single-step mismatch vs reference"

    # --- 2) persistent tiled-state loop (no per-step pad/slice; in-place alias) ---
    T_loop = 3
    rows_padded = _tile_rows(num_neurons)
    psc_loop = 10.0 + 10.0 * jax.random.uniform(k2, (T_loop, num_neurons), jnp.float32)
    state_t = list(init_state_tiled(num_neurons))
    state_ref = list(init_state(num_neurons))
    for step in range(T_loop):
        t_step = t_ms + step * DT
        spk_t, *state_t = lif_step_tiled(
            _to_tiles(psc_loop[step], rows_padded, jnp.float32), t_step, *state_t)
        spk_r, *state_ref = lif_ref(psc_loop[step], jnp.float32(t_step), *state_ref)
        assert jnp.allclose(_from_tiles(spk_t, num_neurons), spk_r, atol=1e-5), \
            "tiled-loop spikes mismatch"
    jax.block_until_ready(state_t)
    for got_t, exp in zip(state_t, state_ref):
        assert jnp.allclose(_from_tiles(got_t, num_neurons), exp, atol=1e-5), \
            "tiled-loop state mismatch"

    # --- 3) fused multi-step kernel (bf16 psc stream, int8 spike stream) ---
    T = 4
    psc_seq = (10.0 + 10.0 * jax.random.uniform(k3, (T, num_neurons), jnp.float32)
               ).astype(jnp.bfloat16)
    times = jnp.float32(t_ms) + DT * jnp.arange(T, dtype=jnp.float32)
    psc_seq_f32 = psc_seq.astype(jnp.float32)      # reference sees same rounding
    state_r = list(init_state(num_neurons))
    ref_spikes = []
    for step in range(T):
        sp, *state_r = lif_ref(psc_seq_f32[step], times[step], *state_r)
        ref_spikes.append(sp)
    ref_spikes = jnp.stack(ref_spikes)

    fused = jax.block_until_ready(
        lif_forward_steps(psc_seq, times, *init_state(num_neurons)))
    assert jnp.allclose(fused[0].astype(jnp.float32), ref_spikes, atol=1e-5), \
        "fused spikes mismatch"
    for got, exp in zip(fused[1:], state_r):
        assert jnp.allclose(got, exp, atol=1e-5), "fused final-state mismatch"

    # --- 4) multi-row-block + partial last block (exercises grid, resident state) ---
    n_big = 80 * LANES        # rows=80 -> padded 96, block 64, grid (2, T), partial block
    T_big = 3
    kb1, _ = jax.random.split(k1)
    psc_big = (10.0 + 10.0 * jax.random.uniform(kb1, (T_big, n_big), jnp.float32)
               ).astype(jnp.bfloat16)
    times_big = DT * jnp.arange(T_big, dtype=jnp.float32)
    psc_big_f32 = psc_big.astype(jnp.float32)
    state_b = list(init_state(n_big))
    ref_spk_b = []
    for step in range(T_big):
        sp, *state_b = lif_ref(psc_big_f32[step], times_big[step], *state_b)
        ref_spk_b.append(sp)
    ref_spk_b = jnp.stack(ref_spk_b)

    fused_b = jax.block_until_ready(
        lif_forward_steps(psc_big, times_big, *init_state(n_big)))
    assert jnp.allclose(fused_b[0].astype(jnp.float32), ref_spk_b, atol=1e-5), \
        "big fused spikes mismatch"
    for got, exp in zip(fused_b[1:], state_b):
        assert jnp.allclose(got, exp, atol=1e-5), "big fused final-state mismatch"

    print("KERNEL_OK")
</pallas_src>

<mosaic_0001>
module attributes {stable_mosaic.version = 11 : i64} {
  func.func @_lif_step_kernel(%arg0: i32, %arg1: memref<1x1xf32, #tpu.memory_space<smem>>, %arg2: memref<32x128xf32, #tpu.memory_space<vmem>>, %arg3: memref<32x128xf32, #tpu.memory_space<vmem>>, %arg4: memref<32x128xf32, #tpu.memory_space<vmem>>, %arg5: memref<32x128xf32, #tpu.memory_space<vmem>>, %arg6: memref<32x128xf32, #tpu.memory_space<vmem>>, %arg7: memref<32x128xf32, #tpu.memory_space<vmem>>, %arg8: memref<32x128xf32, #tpu.memory_space<vmem>>, %arg9: memref<32x128xf32, #tpu.memory_space<vmem>>, %arg10: memref<32x128xf32, #tpu.memory_space<vmem>>, %arg11: memref<32x128xf32, #tpu.memory_space<vmem>>) attributes {dimension_semantics = [#tpu.dimension_semantics<parallel>], iteration_bounds = array<i64: 1>, scalar_prefetch = 0 : i64, scratch_operands = 0 : i64, tpu.core_type = #tpu.core_type<tc>, window_params = [{transform_indices = @transform_0, window_bounds = array<i64: 1, 1>}, {transform_indices = @transform_1, window_bounds = array<i64: 32, 128>}, {transform_indices = @transform_2, window_bounds = array<i64: 32, 128>}, {transform_indices = @transform_3, window_bounds = array<i64: 32, 128>}, {transform_indices = @transform_4, window_bounds = array<i64: 32, 128>}, {transform_indices = @transform_5, window_bounds = array<i64: 32, 128>}, {transform_indices = @transform_6, window_bounds = array<i64: 32, 128>}, {transform_indices = @transform_7, window_bounds = array<i64: 32, 128>}, {transform_indices = @transform_8, window_bounds = array<i64: 32, 128>}, {transform_indices = @transform_9, window_bounds = array<i64: 32, 128>}, {transform_indices = @transform_10, window_bounds = array<i64: 32, 128>}]} {
    %c0 = arith.constant 0 : index
    %c0_0 = arith.constant 0 : index
    %0 = memref.load %arg1[%c0, %c0_0] : memref<1x1xf32, #tpu.memory_space<smem>>
    %c0_1 = arith.constant 0 : index
    %c0_2 = arith.constant 0 : index
    %1 = vector.load %arg2[%c0_1, %c0_2] : memref<32x128xf32, #tpu.memory_space<vmem>>, vector<32x128xf32>
    %c0_3 = arith.constant 0 : index
    %c0_4 = arith.constant 0 : index
    %2 = vector.load %arg3[%c0_3, %c0_4] : memref<32x128xf32, #tpu.memory_space<vmem>>, vector<32x128xf32>
    %c0_5 = arith.constant 0 : index
    %c0_6 = arith.constant 0 : index
    %3 = vector.load %arg4[%c0_5, %c0_6] : memref<32x128xf32, #tpu.memory_space<vmem>>, vector<32x128xf32>
    %c0_7 = arith.constant 0 : index
    %c0_8 = arith.constant 0 : index
    %4 = vector.load %arg5[%c0_7, %c0_8] : memref<32x128xf32, #tpu.memory_space<vmem>>, vector<32x128xf32>
    %c0_9 = arith.constant 0 : index
    %c0_10 = arith.constant 0 : index
    %5 = vector.load %arg6[%c0_9, %c0_10] : memref<32x128xf32, #tpu.memory_space<vmem>>, vector<32x128xf32>
    %cst = arith.constant 0.000000e+00 : f32
    %6 = vector.broadcast %cst : f32 to vector<32x128xf32>
    %7 = arith.cmpf ole, %4, %6 : vector<32x128xf32>
    %cst_11 = arith.constant -6.500000e+01 : f32
    %8 = vector.broadcast %cst_11 : f32 to vector<32x128xf32>
    %9 = arith.subf %2, %8 : vector<32x128xf32>
    %cst_12 = arith.constant 0.951229453 : f32
    %10 = vector.broadcast %cst_12 : f32 to vector<32x128xf32>
    %11 = arith.mulf %9, %10 : vector<32x128xf32>
    %cst_13 = arith.constant -6.500000e+01 : f32
    %12 = vector.broadcast %cst_13 : f32 to vector<32x128xf32>
    %13 = arith.addf %12, %11 : vector<32x128xf32>
    %14 = arith.addf %13, %1 : vector<32x128xf32>
    %15 = arith.select %7, %14, %2 : vector<32x128xi1>, vector<32x128xf32>
    %cst_14 = arith.constant -1.000000e+02 : f32
    %cst_15 = arith.constant 0.000000e+00 : f32
    %16 = vector.broadcast %cst_14 : f32 to vector<32x128xf32>
    %17 = arith.maximumf %16, %15 : vector<32x128xf32>
    %18 = vector.broadcast %cst_15 : f32 to vector<32x128xf32>
    %19 = arith.minimumf %18, %17 : vector<32x128xf32>
    %20 = arith.cmpf oge, %19, %3 : vector<32x128xf32>
    %21 = arith.andi %20, %7 : vector<32x128xi1>
    %22 = vector.broadcast %0 : f32 to vector<32x128xf32>
    %23 = arith.select %21, %22, %5 : vector<32x128xi1>, vector<32x128xf32>
    %cst_16 = arith.constant -7.000000e+01 : f32
    %24 = vector.broadcast %cst_16 : f32 to vector<32x128xf32>
    %25 = arith.select %21, %24, %19 : vector<32x128xi1>, vector<32x128xf32>
    %cst_17 = arith.constant 2.000000e+00 : f32
    %26 = vector.broadcast %cst_17 : f32 to vector<32x128xf32>
    %27 = arith.select %21, %26, %4 : vector<32x128xi1>, vector<32x128xf32>
    %cst_18 = arith.constant 1.000000e+00 : f32
    %28 = vector.broadcast %cst_18 : f32 to vector<32x128xf32>
    %29 = arith.subf %27, %28 : vector<32x128xf32>
    %cst_19 = arith.constant 0.000000e+00 : f32
    %30 = vector.broadcast %cst_19 : f32 to vector<32x128xf32>
    %31 = arith.maximumf %29, %30 : vector<32x128xf32>
    %cst_20 = arith.constant -4.500000e+01 : f32
    %cst_21 = arith.constant -5.500000e+01 : f32
    %32 = vector.broadcast %cst_20 : f32 to vector<32x128xf32>
    %33 = vector.broadcast %cst_21 : f32 to vector<32x128xf32>
    %34 = arith.select %21, %32, %33 : vector<32x128xi1>, vector<32x128xf32>
    %35 = arith.subf %34, %3 : vector<32x128xf32>
    %cst_22 = arith.constant 5.000000e-02 : f32
    %36 = vector.broadcast %cst_22 : f32 to vector<32x128xf32>
    %37 = arith.mulf %36, %35 : vector<32x128xf32>
    %38 = arith.addf %3, %37 : vector<32x128xf32>
    %39 = arith.extui %21 : vector<32x128xi1> to vector<32x128xi32>
    %40 = arith.sitofp %39 : vector<32x128xi32> to vector<32x128xf32>
    %c0_23 = arith.constant 0 : index
    %c0_24 = arith.constant 0 : index
    %41 = vector.load %arg7[%c0_23, %c0_24] : memref<32x128xf32, #tpu.memory_space<vmem>>, vector<32x128xf32>
    tpu.vector_store %arg7[%c0_23, %c0_24], %40 {strides = array<i32>} : memref<32x128xf32, #tpu.memory_space<vmem>>, vector<32x128xf32>,
    %c0_25 = arith.constant 0 : index
    %c0_26 = arith.constant 0 : index
    %42 = vector.load %arg8[%c0_25, %c0_26] : memref<32x128xf32, #tpu.memory_space<vmem>>, vector<32x128xf32>
    tpu.vector_store %arg8[%c0_25, %c0_26], %25 {strides = array<i32>} : memref<32x128xf32, #tpu.memory_space<vmem>>, vector<32x128xf32>,
    %c0_27 = arith.constant 0 : index
    %c0_28 = arith.constant 0 : index
    %43 = vector.load %arg9[%c0_27, %c0_28] : memref<32x128xf32, #tpu.memory_space<vmem>>, vector<32x128xf32>
    tpu.vector_store %arg9[%c0_27, %c0_28], %38 {strides = array<i32>} : memref<32x128xf32, #tpu.memory_space<vmem>>, vector<32x128xf32>,
    %c0_29 = arith.constant 0 : index
    %c0_30 = arith.constant 0 : index
    %44 = vector.load %arg10[%c0_29, %c0_30] : memref<32x128xf32, #tpu.memory_space<vmem>>, vector<32x128xf32>
    tpu.vector_store %arg10[%c0_29, %c0_30], %31 {strides = array<i32>} : memref<32x128xf32, #tpu.memory_space<vmem>>, vector<32x128xf32>,
    %c0_31 = arith.constant 0 : index
    %c0_32 = arith.constant 0 : index
    %45 = vector.load %arg11[%c0_31, %c0_32] : memref<32x128xf32, #tpu.memory_space<vmem>>, vector<32x128xf32>
    tpu.vector_store %arg11[%c0_31, %c0_32], %23 {strides = array<i32>} : memref<32x128xf32, #tpu.memory_space<vmem>>, vector<32x128xf32>,
    return
  }
  func.func @transform_0(%arg0: i32) -> (i32, i32) {
    %c0_i32 = arith.constant 0 : i32
    %c0_i32_0 = arith.constant 0 : i32
    %c0_i32_1 = arith.constant 0 : i32
    return %c0_i32, %c0_i32_0 : i32, i32
  }
  func.func @transform_1(%arg0: i32) -> (i32, i32) {
    %c0_i32 = arith.constant 0 : i32
    %c0_i32_0 = arith.constant 0 : i32
    return %arg0, %c0_i32 : i32, i32
  }
  func.func @transform_2(%arg0: i32) -> (i32, i32) {
    %c0_i32 = arith.constant 0 : i32
    %c0_i32_0 = arith.constant 0 : i32
    return %arg0, %c0_i32 : i32, i32
  }
  func.func @transform_3(%arg0: i32) -> (i32, i32) {
    %c0_i32 = arith.constant 0 : i32
    %c0_i32_0 = arith.constant 0 : i32
    return %arg0, %c0_i32 : i32, i32
  }
  func.func @transform_4(%arg0: i32) -> (i32, i32) {
    %c0_i32 = arith.constant 0 : i32
    %c0_i32_0 = arith.constant 0 : i32
    return %arg0, %c0_i32 : i32, i32
  }
  func.func @transform_5(%arg0: i32) -> (i32, i32) {
    %c0_i32 = arith.constant 0 : i32
    %c0_i32_0 = arith.constant 0 : i32
    return %arg0, %c0_i32 : i32, i32
  }
  func.func @transform_6(%arg0: i32) -> (i32, i32) {
    %c0_i32 = arith.constant 0 : i32
    %c0_i32_0 = arith.constant 0 : i32
    return %arg0, %c0_i32 : i32, i32
  }
  func.func @transform_7(%arg0: i32) -> (i32, i32) {
    %c0_i32 = arith.constant 0 : i32
    %c0_i32_0 = arith.constant 0 : i32
    return %arg0, %c0_i32 : i32, i32
  }
  func.func @transform_8(%arg0: i32) -> (i32, i32) {
    %c0_i32 = arith.constant 0 : i32
    %c0_i32_0 = arith.constant 0 : i32
    return %arg0, %c0_i32 : i32, i32
  }
  func.func @transform_9(%arg0: i32) -> (i32, i32) {
    %c0_i32 = arith.constant 0 : i32
    %c0_i32_0 = arith.constant 0 : i32
    return %arg0, %c0_i32 : i32, i32
  }
  func.func @transform_10(%arg0: i32) -> (i32, i32) {
    %c0_i32 = arith.constant 0 : i32
    %c0_i32_0 = arith.constant 0 : i32
    return %arg0, %c0_i32 : i32, i32
  }
}

</mosaic_0001>

<llo_original>
// kernel: lif_step_tiled.1
$region0: #{lif_step_tiled.1}
  #allocation0 [shape = 'u32[]', space=smem, size = 0x4, offset = 0x4, fixed_abs, tag = 'smem constant byte address 0x4 - core index']
  #allocation1 [shape = 'u32[144,128]{1,0:T(1,128)}', space=vmem, size = 0x12000, scoped, tag = 'internal scratch']
  #allocation2 [shape = 'f32[1,1]{1,0:T(1,128)S(6)}', space=smem, size = 0x200, scoped, tag = 'scoped memory for lif_step_tiled.1']
  %s0 = inlined_call_operand.<no memory space> [shape: f32[1,1], index: 0, kind: input, shape index: {}]
  %s1 = inlined_call_operand.hbm [shape: f32[32,128], index: 1, kind: input, shape index: {}]
  %s2 = inlined_call_operand.vmem [shape: f32[32,128], index: 2, kind: input, shape index: {}, may-alias: {2,7}]
  %s3 = inlined_call_operand.vmem [shape: f32[32,128], index: 3, kind: input, shape index: {}, may-alias: {3,8}]
  %s4 = inlined_call_operand.hbm [shape: f32[32,128], index: 4, kind: input, shape index: {}, may-alias: {4,9}]
  %s5 = inlined_call_operand.vmem [shape: f32[32,128], index: 5, kind: input, shape index: {}, may-alias: {5,10}]
  %s6 = inlined_call_operand.vmem [shape: f32[32,128], index: 6, kind: output, shape index: {0}]
  %s7 = inlined_call_operand.vmem [shape: f32[32,128], index: 7, kind: output, shape index: {1}, may-alias: {2,7}]
  %s8 = inlined_call_operand.vmem [shape: f32[32,128], index: 8, kind: output, shape index: {2}, may-alias: {3,8}]
  %s9 = inlined_call_operand.hbm [shape: f32[32,128], index: 9, kind: output, shape index: {3}, may-alias: {4,9}]
  %s10 = inlined_call_operand.vmem [shape: f32[32,128], index: 10, kind: output, shape index: {4}, may-alias: {5,10}]
  %11 = xla_tuple %s6, %s7, %s8, %s9, %s10
  %s12 = sld [smem:[#allocation0]]
  $region74: #{lif_step_tiled.1} parent=0
    _
  %s14 = ssub.s32 1, %s12
  %s15 = scalar_select 0, %s14, %s12
  %16 = sst [smem:[#allocation2]] %s0
  $region1: #{lif_step_tiled.1} parent=0
    #allocation3 [shape = 'u8[16384]{0}', space=vmem, size = 0x4000, scoped, tag = 'input window, operand 1, single buffered']
    #allocation4 [shape = 's32[1]{0}', space=sflag, size = 0x4, scoped, tag = 'scoped memory for lif_step_tiled.1']
    #allocation5 [shape = 's32[1]{0}', space=sflag, size = 0x4, scoped, tag = 'scoped memory for lif_step_tiled.1']
    #allocation6 [shape = 'u8[16384]{0}', space=vmem, size = 0x4000, scoped, tag = 'input window, operand 4, single buffered']
    #allocation7 [shape = 's32[1]{0}', space=sflag, size = 0x4, scoped, tag = 'scoped memory for lif_step_tiled.1']
    #allocation8 [shape = 'u8[16384]{0}', space=vmem, size = 0x4000, scoped, tag = 'output window, operand 3, single buffered']
    %17 = vsyncpa [#allocation4], 0
    %18 = vsyncpa [#allocation7], 0
    %19 = vsyncpa [#allocation5], 0
    // Predicated region
    $region2: #{lif_step_tiled.1} parent=1 // pred_check
      _
    $region3: #{lif_step_tiled.1} parent=1 // pred_check_branch
      %21 = sbr.rel (0) target = $region5
    $region4: #{lif_step_tiled.1} parent=1 // pred_region
      _
    $region5: #{lif_step_tiled.1} parent=1 // pred_fallthru
      _
    // Predicated region
    $region6: #{lif_step_tiled.1} parent=1 // pred_check
      _
    $region7: #{lif_step_tiled.1} parent=1 // pred_check_branch
      %23 = sbr.rel (0) target = $region9
    $region8: #{lif_step_tiled.1} parent=1 // pred_region
      %s25 = ssub.s32 512, 512
      %26 = vsyncadd [#allocation4], %s25
      %s27 = sshll.u32 [#allocation3], 4
      %s28 = int_to_ptr.vmem [resolvable:$true] %s27
      %33 = dma.hbm_to_vmem [thread:$0]  %s1, 512, %s28, [#allocation4], 128, 128, 8
    $region9: #{lif_step_tiled.1} parent=1 // pred_fallthru
      _
    // Predicated region
    $region10: #{lif_step_tiled.1} parent=1 // pred_check
      _
    $region11: #{lif_step_tiled.1} parent=1 // pred_check_branch
      %35 = sbr.rel (0) target = $region13
    $region12: #{lif_step_tiled.1} parent=1 // pred_region
      _
    $region13: #{lif_step_tiled.1} parent=1 // pred_fallthru
      _
    // Predicated region
    $region14: #{lif_step_tiled.1} parent=1 // pred_check
      _
    $region15: #{lif_step_tiled.1} parent=1 // pred_check_branch
      %37 = sbr.rel (0) target = $region17
    $region16: #{lif_step_tiled.1} parent=1 // pred_region
      _
    $region17: #{lif_step_tiled.1} parent=1 // pred_fallthru
      _
    // Predicated region
    $region18: #{lif_step_tiled.1} parent=1 // pred_check
      _
    $region19: #{lif_step_tiled.1} parent=1 // pred_check_branch
      %39 = sbr.rel (0) target = $region21
    $region20: #{lif_step_tiled.1} parent=1 // pred_region
      %s41 = ssub.s32 512, 512
      %42 = vsyncadd [#allocation7], %s41
      %s43 = sshll.u32 [#allocation6], 4
      %s44 = int_to_ptr.vmem [resolvable:$true] %s43
      %49 = dma.hbm_to_vmem [thread:$0]  %s4, 512, %s44, [#allocation7], 128, 128, 8
    $region21: #{lif_step_tiled.1} parent=1 // pred_fallthru
      _
    // Predicated region
    $region22: #{lif_step_tiled.1} parent=1 // pred_check
      _
    $region23: #{lif_step_tiled.1} parent=1 // pred_check_branch
      %51 = sbr.rel (0) target = $region25
    $region24: #{lif_step_tiled.1} parent=1 // pred_region
      _
    $region25: #{lif_step_tiled.1} parent=1 // pred_fallthru
      _
    // Predicated region
    $region26: #{lif_step_tiled.1} parent=1 // pred_check
      _
    $region27: #{lif_step_tiled.1} parent=1 // pred_check_branch
      %53 = sbr.rel (0) target = $region29
    $region28: #{lif_step_tiled.1} parent=1 // pred_region
      %54 = dma.done [#allocation4], 512
    $region29: #{lif_step_tiled.1} parent=1 // pred_fallthru
      _
    // Predicated region
    $region30: #{lif_step_tiled.1} parent=1 // pred_check
      _
    $region31: #{lif_step_tiled.1} parent=1 // pred_check_branch
      %56 = sbr.rel (0) target = $region33
    $region32: #{lif_step_tiled.1} parent=1 // pred_region
      %57 = dma.done [#allocation7], 512
    $region33: #{lif_step_tiled.1} parent=1 // pred_fallthru
      _
    %s58 = sld [smem:[#allocation2]]
    %v59 = vld [vmem:[#allocation3] sm:$0xff]
    %v60 = vld [vmem:[#allocation3 + $0x8] sm:$0xff]
    %v61 = vld [vmem:[#allocation3 + $0x10] sm:$0xff]
    %v62 = vld [vmem:[#allocation3 + $0x18] sm:$0xff]
    %v63 = vld [vmem:[%s2] sm:$0xff]
    %v64 = vld [vmem:[%s2 + $0x8] sm:$0xff]
    %v65 = vld [vmem:[%s2 + $0x10] sm:$0xff]
    %v66 = vld [vmem:[%s2 + $0x18] sm:$0xff]
    %v67 = vld [vmem:[%s3] sm:$0xff]
    %v68 = vld [vmem:[%s3 + $0x8] sm:$0xff]
    %v69 = vld [vmem:[%s3 + $0x10] sm:$0xff]
    %v70 = vld [vmem:[%s3 + $0x18] sm:$0xff]
    %v71 = vld [vmem:[#allocation6] sm:$0xff]
    %v72 = vld [vmem:[#allocation6 + $0x8] sm:$0xff]
    %v73 = vld [vmem:[#allocation6 + $0x10] sm:$0xff]
    %v74 = vld [vmem:[#allocation6 + $0x18] sm:$0xff]
    %v75 = vld [vmem:[%s5] sm:$0xff]
    %v76 = vld [vmem:[%s5 + $0x8] sm:$0xff]
    %v77 = vld [vmem:[%s5 + $0x10] sm:$0xff]
    %v78 = vld [vmem:[%s5 + $0x18] sm:$0xff]
    %vm79 = vcmp.le.f32.partialorder %v71, 0.0
    %vm80 = vcmp.le.f32.partialorder %v72, 0.0
    %vm81 = vcmp.le.f32.partialorder %v73, 0.0
    %vm82 = vcmp.le.f32.partialorder %v74, 0.0
    %v83 = vsub.f32 %v63, -65.0
    %v84 = vsub.f32 %v64, -65.0
    %v85 = vsub.f32 %v65, -65.0
    %v86 = vsub.f32 %v66, -65.0
    %v87 = vmul.f32 %v83, 0.95122945
    %v88 = vmul.f32 %v84, 0.95122945
    %v89 = vmul.f32 %v85, 0.95122945
    %v90 = vmul.f32 %v86, 0.95122945
    %v91 = vadd.f32 %v87, -65.0
    %v92 = vadd.f32 %v88, -65.0
    %v93 = vadd.f32 %v89, -65.0
    %v94 = vadd.f32 %v90, -65.0
    %v95 = vadd.f32 %v91, %v59
    %v96 = vadd.f32 %v92, %v60
    %v97 = vadd.f32 %v93, %v61
    %v98 = vadd.f32 %v94, %v62
    %v99 = vsel %vm79, %v95, %v63
    %v100 = vsel %vm80, %v96, %v64
    %v101 = vsel %vm81, %v97, %v65
    %v102 = vsel %vm82, %v98, %v66
    %v103 = vmax.f32 %v99, -100.0
    %v104 = vmax.f32 %v100, -100.0
    %v105 = vmax.f32 %v101, -100.0
    %v106 = vmax.f32 %v102, -100.0
    %v107 = vmin.f32 %v103, 0.0
    %v108 = vmin.f32 %v104, 0.0
    %v109 = vmin.f32 %v105, 0.0
    %v110 = vmin.f32 %v106, 0.0
    %vm111 = vcmp.ge.f32.partialorder %v107, %v67
    %vm112 = vcmp.ge.f32.partialorder %v108, %v68
    %vm113 = vcmp.ge.f32.partialorder %v109, %v69
    %vm114 = vcmp.ge.f32.partialorder %v110, %v70
    %vm115 = vmand %vm111, %vm79
    %vm116 = vmand %vm112, %vm80
    %vm117 = vmand %vm113, %vm81
    %vm118 = vmand %vm114, %vm82
    %v119 = vstv %s58
    %v120 = vsel %vm115, %v119, %v75
    %v121 = vsel %vm116, %v119, %v76
    %v122 = vsel %vm117, %v119, %v77
    %v123 = vsel %vm118, %v119, %v78
    %v124 = vsel %vm115, -70.0, %v107
    %v125 = vsel %vm116, -70.0, %v108
    %v126 = vsel %vm117, -70.0, %v109
    %v127 = vsel %vm118, -70.0, %v110
    %v128 = vsel %vm115, 2.0, %v71
    %v129 = vsel %vm116, 2.0, %v72
    %v130 = vsel %vm117, 2.0, %v73
    %v131 = vsel %vm118, 2.0, %v74
    %v132 = vsub.f32 %v128, 1.0
    %v133 = vsub.f32 %v129, 1.0
    %v134 = vsub.f32 %v130, 1.0
    %v135 = vsub.f32 %v131, 1.0
    %v136 = vmax.f32 %v132, 0.0
    %v137 = vmax.f32 %v133, 0.0
    %v138 = vmax.f32 %v134, 0.0
    %v139 = vmax.f32 %v135, 0.0
    %v140 = vsel %vm115, -45.0, -55.0
    %v141 = vsel %vm116, -45.0, -55.0
    %v142 = vsel %vm117, -45.0, -55.0
    %v143 = vsel %vm118, -45.0, -55.0
    %v144 = vsub.f32 %v140, %v67
    %v145 = vsub.f32 %v141, %v68
    %v146 = vsub.f32 %v142, %v69
    %v147 = vsub.f32 %v143, %v70
    %v148 = vmul.f32 %v144, 0.05
    %v149 = vmul.f32 %v145, 0.05
    %v150 = vmul.f32 %v146, 0.05
    %v151 = vmul.f32 %v147, 0.05
    %v152 = vadd.f32 %v67, %v148
    %v153 = vadd.f32 %v68, %v149
    %v154 = vadd.f32 %v69, %v150
    %v155 = vadd.f32 %v70, %v151
    %v156 = vsel %vm115, 1, 0
    %v157 = vsel %vm116, 1, 0
    %v158 = vsel %vm117, 1, 0
    %v159 = vsel %vm118, 1, 0
    %v160 = vcvt.s32.f32 %v156
    %v161 = vcvt.s32.f32 %v157
    %v162 = vcvt.s32.f32 %v158
    %v163 = vcvt.s32.f32 %v159
    %164 = vst [vmem:[%s6] sm:$0xff] %v160
    %165 = vst [vmem:[%s6 + $0x8] sm:$0xff] %v161
    %166 = vst [vmem:[%s6 + $0x10] sm:$0xff] %v162
    %167 = vst [vmem:[%s6 + $0x18] sm:$0xff] %v163
    %168 = vst [vmem:[%s7] sm:$0xff] %v124
    %169 = vst [vmem:[%s7 + $0x8] sm:$0xff] %v125
    %170 = vst [vmem:[%s7 + $0x10] sm:$0xff] %v126
    %171 = vst [vmem:[%s7 + $0x18] sm:$0xff] %v127
    %172 = vst [vmem:[%s8] sm:$0xff] %v152
    %173 = vst [vmem:[%s8 + $0x8] sm:$0xff] %v153
    %174 = vst [vmem:[%s8 + $0x10] sm:$0xff] %v154
    %175 = vst [vmem:[%s8 + $0x18] sm:$0xff] %v155
    %176 = vst [vmem:[#allocation8] sm:$0xff] %v136
    %177 = vst [vmem:[#allocation8 + $0x8] sm:$0xff] %v137
    %178 = vst [vmem:[#allocation8 + $0x10] sm:$0xff] %v138
    %179 = vst [vmem:[#allocation8 + $0x18] sm:$0xff] %v139
    %180 = vst [vmem:[%s10] sm:$0xff] %v120
    %181 = vst [vmem:[%s10 + $0x8] sm:$0xff] %v121
    %182 = vst [vmem:[%s10 + $0x10] sm:$0xff] %v122
    %183 = vst [vmem:[%s10 + $0x18] sm:$0xff] %v123
    // Predicated region
    $region34: #{lif_step_tiled.1} parent=1 // pred_check
      _
    $region35: #{lif_step_tiled.1} parent=1 // pred_check_branch
      %185 = sbr.rel (0) target = $region37
    $region36: #{lif_step_tiled.1} parent=1 // pred_region
      _
    $region37: #{lif_step_tiled.1} parent=1 // pred_fallthru
      _
    // Predicated region
    $region38: #{lif_step_tiled.1} parent=1 // pred_check
      _
    $region39: #{lif_step_tiled.1} parent=1 // pred_check_branch
      %187 = sbr.rel (0) target = $region41
    $region40: #{lif_step_tiled.1} parent=1 // pred_region
      _
    $region41: #{lif_step_tiled.1} parent=1 // pred_fallthru
      _
    // Predicated region
    $region42: #{lif_step_tiled.1} parent=1 // pred_check
      _
    $region43: #{lif_step_tiled.1} parent=1 // pred_check_branch
      %189 = sbr.rel (0) target = $region45
    $region44: #{lif_step_tiled.1} parent=1 // pred_region
      _
    $region45: #{lif_step_tiled.1} parent=1 // pred_fallthru
      _
    // Predicated region
    $region46: #{lif_step_tiled.1} parent=1 // pred_check
      _
    $region47: #{lif_step_tiled.1} parent=1 // pred_check_branch
      %191 = sbr.rel (0) target = $region49
    $region48: #{lif_step_tiled.1} parent=1 // pred_region
      %s193 = ssub.s32 512, 512
      %194 = vsyncadd [#allocation5], %s193
      %s195 = sshll.u32 [#allocation8], 4
      %s196 = int_to_ptr.vmem [resolvable:$true] %s195
      %201 = dma.vmem_to_hbm [thread:$0]  %s196, 512, %s9, [#allocation5], 128, 128, 8
    $region49: #{lif_step_tiled.1} parent=1 // pred_fallthru
      _
    // Predicated region
    $region50: #{lif_step_tiled.1} parent=1 // pred_check
      _
    $region51: #{lif_step_tiled.1} parent=1 // pred_check_branch
      %203 = sbr.rel (0) target = $region53
    $region52: #{lif_step_tiled.1} parent=1 // pred_region
      _
    $region53: #{lif_step_tiled.1} parent=1 // pred_fallthru
      _
    // Predicated region
    $region54: #{lif_step_tiled.1} parent=1 // pred_check
      _
    $region55: #{lif_step_tiled.1} parent=1 // pred_check_branch
      %205 = sbr.rel (0) target = $region57
    $region56: #{lif_step_tiled.1} parent=1 // pred_region
      _
    $region57: #{lif_step_tiled.1} parent=1 // pred_fallthru
      _
    // Predicated region
    $region58: #{lif_step_tiled.1} parent=1 // pred_check
      _
    $region59: #{lif_step_tiled.1} parent=1 // pred_check_branch
      %207 = sbr.rel (0) target = $region61
    $region60: #{lif_step_tiled.1} parent=1 // pred_region
      _
    $region61: #{lif_step_tiled.1} parent=1 // pred_fallthru
      _
    // Predicated region
    $region62: #{lif_step_tiled.1} parent=1 // pred_check
      _
    $region63: #{lif_step_tiled.1} parent=1 // pred_check_branch
      %209 = sbr.rel (0) target = $region65
    $region64: #{lif_step_tiled.1} parent=1 // pred_region
      _
    $region65: #{lif_step_tiled.1} parent=1 // pred_fallthru
      _
    // Predicated region
    $region66: #{lif_step_tiled.1} parent=1 // pred_check
      _
    $region67: #{lif_step_tiled.1} parent=1 // pred_check_branch
      %211 = sbr.rel (0) target = $region69
    $region68: #{lif_step_tiled.1} parent=1 // pred_region
      %212 = dma.done [#allocation5], 512
    $region69: #{lif_step_tiled.1} parent=1 // pred_fallthru
      _
    // Predicated region
    $region70: #{lif_step_tiled.1} parent=1 // pred_check
      _
    $region71: #{lif_step_tiled.1} parent=1 // pred_check_branch
      %214 = sbr.rel (0) target = $region73
    $region72: #{lif_step_tiled.1} parent=1 // pred_region
      _
    $region73: #{lif_step_tiled.1} parent=1 // pred_fallthru
      _
    %215 = vsyncpa [#allocation4], 1
    %216 = vsyncpa [#allocation7], 1
    %217 = vsyncpa [#allocation5], 1

</llo_original>
